<compile_context>
chip_gen: v5e
topology: v5e:2x2
jax: 0.10.0
libtpu: 0.0.40
codegen_flags: <defaults>
</compile_context>

<pallas_src>
import functools

import jax
import jax.numpy as jnp
from jax.experimental import pallas as pl
from jax.experimental.pallas import tpu as pltpu


N_PAD = 128  # lane-dense output width (real N = 10 is sliced out in the wrapper)


def _round_up(v, m):
    return (v + m - 1) // m * m


def _linear_relu_kernel(x_ref, w_ref, b_ref, o_ref):
    """Eval-mode forward for one batch tile: relu(x @ W_t + b)."""
    y = jnp.dot(x_ref[...], w_ref[...], preferred_element_type=jnp.float32)
    y = y + b_ref[...]                       # (1, N_PAD) broadcasts over rows
    o_ref[...] = jnp.maximum(y, 0.0).astype(o_ref.dtype)


def _linear_relu_dropout_kernel(x_ref, w_ref, b_ref, r_ref, o_ref, *,
                                threshold, inv_keep):
    """Training-mode forward for one batch tile: dropout(relu(x @ W_t + b))."""
    y = jnp.dot(x_ref[...], w_ref[...], preferred_element_type=jnp.float32)
    y = jnp.maximum(y + b_ref[...], 0.0)
    # r_ref holds int32 random bits; mask the sign bit -> uniform over [0, 2^31).
    # keep iff bits >= p * 2^31  (probability 1 - p), fuse mask + 1/(1-p) scale.
    masked = r_ref[...] & jnp.int32(0x7FFFFFFF)
    keep = masked >= jnp.int32(threshold)
    o_ref[...] = jnp.where(keep, y * jnp.float32(inv_keep),
                           jnp.float32(0.0)).astype(o_ref.dtype)


def layer5_forward(x, w_t, b, *, training=False, p=0.5, rng_key=None,
                   tile_b=1024):
    """x: (B, 512) f32, w_t: (512, 10) (pre-transposed nn.Linear weight),
    b: (10,).  Returns (B, 10)."""
    B, K = x.shape
    K2, N = w_t.shape
    assert K == K2

    # --- lane-dense padding of the N dimension (10 -> 128) -------------------
    w_pad = jnp.zeros((K, N_PAD), dtype=x.dtype).at[:, :N].set(w_t)
    b_pad = jnp.zeros((1, N_PAD), dtype=x.dtype).at[0, :N].set(b)

    # --- batch tiling ---------------------------------------------------------
    tile_b = min(tile_b, _round_up(B, 8))          # multiple of 8 sublanes
    b_padded = _round_up(B, tile_b)
    if b_padded != B:
        x = jnp.pad(x, ((0, b_padded - B), (0, 0)))
    grid = (b_padded // tile_b,)

    out_shape = jax.ShapeDtypeStruct((b_padded, N_PAD), x.dtype)
    cost = pl.CostEstimate(
        flops=2 * b_padded * K * N_PAD,
        transcendentals=0,
        bytes_accessed=(b_padded * K * x.dtype.itemsize
                        + b_padded * N_PAD * x.dtype.itemsize
                        + K * N_PAD * x.dtype.itemsize),
    )
    cparams = pltpu.CompilerParams(
        dimension_semantics=("parallel",),
        vmem_limit_bytes=32 * 1024 * 1024,
    )

    x_spec = pl.BlockSpec((tile_b, K), lambda i: (i, 0))
    w_spec = pl.BlockSpec((K, N_PAD), lambda i: (0, 0))
    b_spec = pl.BlockSpec((1, N_PAD), lambda i: (0, 0))
    o_spec = pl.BlockSpec((tile_b, N_PAD), lambda i: (i, 0))

    if not training:
        out = pl.pallas_call(
            _linear_relu_kernel,
            out_shape=out_shape,
            grid_spec=pltpu.PrefetchScalarGridSpec(
                num_scalar_prefetch=0,
                grid=grid,
                in_specs=[x_spec, w_spec, b_spec],
                out_specs=o_spec,
            ),
            compiler_params=cparams,
            cost_estimate=cost,
        )(x, w_pad, b_pad)
        return out[:B, :N]

    # Training path: pre-generate random bits (one int32 per output element);
    # each batch tile reads its own slab, so masks differ across tiles.
    # TODO(synk): bit-exact parity with torch.nn.Dropout's RNG stream is not possible.
    if rng_key is None:
        rng_key = jax.random.PRNGKey(0)
    bits_u32 = jax.random.bits(rng_key, (b_padded, N_PAD), dtype=jnp.uint32)
    bits_i32 = jax.lax.bitcast_convert_type(bits_u32, jnp.int32)

    threshold = min(int(round(p * (1 << 31))), (1 << 31) - 1)
    inv_keep = 1.0 / (1.0 - p)
    r_spec = pl.BlockSpec((tile_b, N_PAD), lambda i: (i, 0))

    out = pl.pallas_call(
        functools.partial(_linear_relu_dropout_kernel,
                          threshold=threshold, inv_keep=inv_keep),
        out_shape=out_shape,
        grid_spec=pltpu.PrefetchScalarGridSpec(
            num_scalar_prefetch=0,
            grid=grid,
            in_specs=[x_spec, w_spec, b_spec, r_spec],
            out_specs=o_spec,
        ),
        compiler_params=cparams,
        cost_estimate=cost,
    )(x, w_pad, b_pad, bits_i32)
    return out[:B, :N]


if __name__ == "__main__":
    key = jax.random.PRNGKey(0)
    kx, kw, kb, kd = jax.random.split(key, 4)

    B, K, N = 8, 512, 10
    x = jax.random.normal(kx, (B, K), dtype=jnp.float32)

    # Deterministic params mimicking nn.Linear's uniform(-1/sqrt(K), 1/sqrt(K)).
    bound = 1.0 / jnp.sqrt(jnp.float32(K))
    w = jax.random.uniform(kw, (N, K), dtype=jnp.float32, minval=-bound, maxval=bound)
    b = jax.random.uniform(kb, (N,), dtype=jnp.float32, minval=-bound, maxval=bound)
    w_t = w.T  # (512, 10)

    # Eval-mode forward (dropout = identity), deterministic check.
    out = jax.block_until_ready(layer5_forward(x, w_t, b, training=False))
    ref = jnp.maximum(x @ w_t + b[None, :], 0.0)
    assert out.shape == (B, N)
    assert jnp.allclose(out, ref, atol=1e-5, rtol=1e-5)

    # Training-mode forward: every element is either 0 or 2 * relu(value).
    p = 0.5
    out_tr = jax.block_until_ready(
        layer5_forward(x, w_t, b, training=True, p=p, rng_key=kd))
    assert out_tr.shape == (B, N)
    scaled_ref = ref / (1.0 - p)
    match = jnp.isclose(out_tr, 0.0, atol=1e-6) | jnp.isclose(
        out_tr, scaled_ref, atol=1e-5, rtol=1e-5)
    assert bool(jnp.all(match))

    print("KERNEL_OK")
</pallas_src>

<mosaic_0001>
module attributes {stable_mosaic.version = 11 : i64} {
  func.func @_linear_relu_kernel(%arg0: i32, %arg1: memref<8x512xf32, #tpu.memory_space<vmem>>, %arg2: memref<512x128xf32, #tpu.memory_space<vmem>>, %arg3: memref<1x128xf32, #tpu.memory_space<vmem>>, %arg4: memref<8x128xf32, #tpu.memory_space<vmem>>) attributes {dimension_semantics = [#tpu.dimension_semantics<parallel>], iteration_bounds = array<i64: 1>, scalar_prefetch = 0 : i64, scratch_operands = 0 : i64, tpu.core_type = #tpu.core_type<tc>, window_params = [{transform_indices = @transform_0, window_bounds = array<i64: 8, 512>}, {pipeline_mode = #tpu.pipeline_mode<synchronous>, transform_indices = @transform_1, window_bounds = array<i64: 512, 128>}, {pipeline_mode = #tpu.pipeline_mode<synchronous>, transform_indices = @transform_2, window_bounds = array<i64: 1, 128>}, {transform_indices = @transform_3, window_bounds = array<i64: 8, 128>}]} {
    %c0 = arith.constant 0 : index
    %c0_0 = arith.constant 0 : index
    %0 = vector.load %arg1[%c0, %c0_0] : memref<8x512xf32, #tpu.memory_space<vmem>>, vector<8x512xf32>
    %c0_1 = arith.constant 0 : index
    %c0_2 = arith.constant 0 : index
    %1 = vector.load %arg2[%c0_1, %c0_2] : memref<512x128xf32, #tpu.memory_space<vmem>>, vector<512x128xf32>
    %cst = arith.constant dense<0.000000e+00> : vector<8x128xf32>
    %2 = tpu.matmul %0, %1, %cst {dimension_numbers = #tpu.dot_dimension_numbers<[1], [0], [0], [1], [0, 0, 1, 1], [], []>} : vector<8x512xf32>, vector<512x128xf32>, vector<8x128xf32> -> vector<8x128xf32>
    %c0_3 = arith.constant 0 : index
    %c0_4 = arith.constant 0 : index
    %3 = vector.load %arg3[%c0_3, %c0_4] : memref<1x128xf32, #tpu.memory_space<vmem>>, vector<1x128xf32>
    %4 = vector.broadcast %3 : vector<1x128xf32> to vector<8x128xf32>
    %5 = arith.addf %2, %4 : vector<8x128xf32>
    %cst_5 = arith.constant 0.000000e+00 : f32
    %6 = vector.broadcast %cst_5 : f32 to vector<8x128xf32>
    %7 = arith.maximumf %5, %6 : vector<8x128xf32>
    %c0_6 = arith.constant 0 : index
    %c0_7 = arith.constant 0 : index
    %8 = vector.load %arg4[%c0_6, %c0_7] : memref<8x128xf32, #tpu.memory_space<vmem>>, vector<8x128xf32>
    tpu.vector_store %arg4[%c0_6, %c0_7], %7 {strides = array<i32>} : memref<8x128xf32, #tpu.memory_space<vmem>>, vector<8x128xf32>,
    return
  }
  func.func @transform_0(%arg0: i32) -> (i32, i32) {
    %c0_i32 = arith.constant 0 : i32
    %c0_i32_0 = arith.constant 0 : i32
    return %arg0, %c0_i32 : i32, i32
  }
  func.func @transform_1(%arg0: i32) -> (i32, i32) {
    %c0_i32 = arith.constant 0 : i32
    %c0_i32_0 = arith.constant 0 : i32
    %c0_i32_1 = arith.constant 0 : i32
    return %c0_i32, %c0_i32_0 : i32, i32
  }
  func.func @transform_2(%arg0: i32) -> (i32, i32) {
    %c0_i32 = arith.constant 0 : i32
    %c0_i32_0 = arith.constant 0 : i32
    %c0_i32_1 = arith.constant 0 : i32
    return %c0_i32, %c0_i32_0 : i32, i32
  }
  func.func @transform_3(%arg0: i32) -> (i32, i32) {
    %c0_i32 = arith.constant 0 : i32
    %c0_i32_0 = arith.constant 0 : i32
    return %arg0, %c0_i32 : i32, i32
  }
}

</mosaic_0001>

<llo_original>
// kernel: tpu_custom_call.1
$region0: #{tpu_custom_call.1}
  #allocation0 [shape = 'u32[]', space=smem, size = 0x4, offset = 0x4, fixed_abs, tag = 'smem constant byte address 0x4 - core index']
  #allocation1 [shape = 'u32[72,128]{1,0:T(1,128)}', space=vmem, size = 0x9000, scoped, tag = 'internal scratch']
  %s0 = inlined_call_operand.hbm [shape: f32[8,512], index: 0, kind: input, shape index: {}]
  %s1 = inlined_call_operand.hbm [shape: f32[512,128], index: 1, kind: input, shape index: {}]
  %s2 = inlined_call_operand.vmem [shape: f32[1,128], index: 2, kind: input, shape index: {}]
  %s3 = inlined_call_operand.hbm [shape: f32[8,128], index: 3, kind: output, shape index: {}]
  %s4 = sld [smem:[#allocation0]]
  $region30: #{tpu_custom_call.1} parent=0
    _
  %s6 = ssub.s32 1, %s4
  %s7 = scalar_select 0, %s6, %s4
  $region1: #{tpu_custom_call.1} parent=0
    #allocation2 [shape = 'u8[16384]{0}', space=vmem, size = 0x4000, scoped, tag = 'input window, operand 0, single buffered']
    #allocation3 [shape = 's32[1]{0}', space=sflag, size = 0x4, scoped, tag = 'scoped memory for tpu_custom_call.1']
    #allocation4 [shape = 's32[1]{0}', space=sflag, size = 0x4, scoped, tag = 'scoped memory for tpu_custom_call.1']
    #allocation5 [shape = 'u8[262144]{0}', space=vmem, size = 0x40000, scoped, tag = 'input window, operand 1, single buffered']
    #allocation6 [shape = 's32[1]{0}', space=sflag, size = 0x4, scoped, tag = 'scoped memory for tpu_custom_call.1']
    #allocation7 [shape = 'u8[4096]{0}', space=vmem, size = 0x1000, scoped, tag = 'output window, operand 0, single buffered']
    %8 = vsyncpa [#allocation3], 0
    %9 = vsyncpa [#allocation6], 0
    %10 = vsyncpa [#allocation4], 0
    // Predicated region
    $region2: #{tpu_custom_call.1} parent=1 // pred_check
      _
    $region3: #{tpu_custom_call.1} parent=1 // pred_check_branch
      %12 = sbr.rel (0) target = $region5
    $region4: #{tpu_custom_call.1} parent=1 // pred_region
      %14 = vsyncadd [#allocation3], 0
      %s16 = sshll.u32 %s0, 4
      %s17 = int_to_ptr.hbm [resolvable:$true] %s16
      %s18 = sshll.u32 [#allocation2], 4
      %s19 = int_to_ptr.vmem [resolvable:$true] %s18
      %21 = dma.hbm_to_vmem [thread:$0]  %s17, 512, %s19, [#allocation3]
    $region5: #{tpu_custom_call.1} parent=1 // pred_fallthru
      _
    // Predicated region
    $region6: #{tpu_custom_call.1} parent=1 // pred_check
      _
    $region7: #{tpu_custom_call.1} parent=1 // pred_check_branch
      %23 = sbr.rel (0) target = $region9
    $region8: #{tpu_custom_call.1} parent=1 // pred_region
      %25 = vsyncadd [#allocation6], 0
      %s26 = sshll.u32 %s1, 4
      %s27 = int_to_ptr.hbm [resolvable:$true] %s26
      %s28 = sshll.u32 [#allocation5], 4
      %s29 = int_to_ptr.vmem [resolvable:$true] %s28
      %34 = dma.hbm_to_vmem [thread:$0]  %s27, 8192, %s29, [#allocation6], 128, 128, 8
    $region9: #{tpu_custom_call.1} parent=1 // pred_fallthru
      _
    // Predicated region
    $region10: #{tpu_custom_call.1} parent=1 // pred_check
      _
    $region11: #{tpu_custom_call.1} parent=1 // pred_check_branch
      %36 = sbr.rel (0) target = $region13
    $region12: #{tpu_custom_call.1} parent=1 // pred_region
      _
    $region13: #{tpu_custom_call.1} parent=1 // pred_fallthru
      _
    // Predicated region
    $region14: #{tpu_custom_call.1} parent=1 // pred_check
      _
    $region15: #{tpu_custom_call.1} parent=1 // pred_check_branch
      %38 = sbr.rel (0) target = $region17
    $region16: #{tpu_custom_call.1} parent=1 // pred_region
      %40 = dma.done [#allocation3], 512
    $region17: #{tpu_custom_call.1} parent=1 // pred_fallthru
      _
    // Predicated region
    $region18: #{tpu_custom_call.1} parent=1 // pred_check
      _
    $region19: #{tpu_custom_call.1} parent=1 // pred_check_branch
      %42 = sbr.rel (0) target = $region21
    $region20: #{tpu_custom_call.1} parent=1 // pred_region
      %44 = dma.done [#allocation6], 8192
    $region21: #{tpu_custom_call.1} parent=1 // pred_fallthru
      _
    %v45 = vld [vmem:[#allocation2] sm:$0xff]
    %v46 = vld [vmem:[#allocation2 + $0x8] sm:$0xff]
    %v47 = vld [vmem:[#allocation2 + $0x10] sm:$0xff]
    %v48 = vld [vmem:[#allocation2 + $0x18] sm:$0xff]
    %v49 = vld [vmem:[#allocation5] sm:$0xff]
    %v50 = vld [vmem:[#allocation5 + $0x8] sm:$0xff]
    %v51 = vld [vmem:[#allocation5 + $0x10] sm:$0xff]
    %v52 = vld [vmem:[#allocation5 + $0x18] sm:$0xff]
    %v53 = vld [vmem:[#allocation5 + $0x20] sm:$0xff]
    %v54 = vld [vmem:[#allocation5 + $0x28] sm:$0xff]
    %v55 = vld [vmem:[#allocation5 + $0x30] sm:$0xff]
    %v56 = vld [vmem:[#allocation5 + $0x38] sm:$0xff]
    %v57 = vld [vmem:[#allocation5 + $0x40] sm:$0xff]
    %v58 = vld [vmem:[#allocation5 + $0x48] sm:$0xff]
    %v59 = vld [vmem:[#allocation5 + $0x50] sm:$0xff]
    %v60 = vld [vmem:[#allocation5 + $0x58] sm:$0xff]
    %v61 = vld [vmem:[#allocation5 + $0x60] sm:$0xff]
    %v62 = vld [vmem:[#allocation5 + $0x68] sm:$0xff]
    %v63 = vld [vmem:[#allocation5 + $0x70] sm:$0xff]
    %v64 = vld [vmem:[#allocation5 + $0x78] sm:$0xff]
    %v65 = vld [vmem:[#allocation5 + $0x80] sm:$0xff]
    %v66 = vld [vmem:[#allocation5 + $0x88] sm:$0xff]
    %v67 = vld [vmem:[#allocation5 + $0x90] sm:$0xff]
    %v68 = vld [vmem:[#allocation5 + $0x98] sm:$0xff]
    %v69 = vld [vmem:[#allocation5 + $0xa0] sm:$0xff]
    %v70 = vld [vmem:[#allocation5 + $0xa8] sm:$0xff]
    %v71 = vld [vmem:[#allocation5 + $0xb0] sm:$0xff]
    %v72 = vld [vmem:[#allocation5 + $0xb8] sm:$0xff]
    %v73 = vld [vmem:[#allocation5 + $0xc0] sm:$0xff]
    %v74 = vld [vmem:[#allocation5 + $0xc8] sm:$0xff]
    %v75 = vld [vmem:[#allocation5 + $0xd0] sm:$0xff]
    %v76 = vld [vmem:[#allocation5 + $0xd8] sm:$0xff]
    %v77 = vld [vmem:[#allocation5 + $0xe0] sm:$0xff]
    %v78 = vld [vmem:[#allocation5 + $0xe8] sm:$0xff]
    %v79 = vld [vmem:[#allocation5 + $0xf0] sm:$0xff]
    %v80 = vld [vmem:[#allocation5 + $0xf8] sm:$0xff]
    %v81 = vld [vmem:[#allocation5 + $0x100] sm:$0xff]
    %v82 = vld [vmem:[#allocation5 + $0x108] sm:$0xff]
    %v83 = vld [vmem:[#allocation5 + $0x110] sm:$0xff]
    %v84 = vld [vmem:[#allocation5 + $0x118] sm:$0xff]
    %v85 = vld [vmem:[#allocation5 + $0x120] sm:$0xff]
    %v86 = vld [vmem:[#allocation5 + $0x128] sm:$0xff]
    %v87 = vld [vmem:[#allocation5 + $0x130] sm:$0xff]
    %v88 = vld [vmem:[#allocation5 + $0x138] sm:$0xff]
    %v89 = vld [vmem:[#allocation5 + $0x140] sm:$0xff]
    %v90 = vld [vmem:[#allocation5 + $0x148] sm:$0xff]
    %v91 = vld [vmem:[#allocation5 + $0x150] sm:$0xff]
    %v92 = vld [vmem:[#allocation5 + $0x158] sm:$0xff]
    %v93 = vld [vmem:[#allocation5 + $0x160] sm:$0xff]
    %v94 = vld [vmem:[#allocation5 + $0x168] sm:$0xff]
    %v95 = vld [vmem:[#allocation5 + $0x170] sm:$0xff]
    %v96 = vld [vmem:[#allocation5 + $0x178] sm:$0xff]
    %v97 = vld [vmem:[#allocation5 + $0x180] sm:$0xff]
    %v98 = vld [vmem:[#allocation5 + $0x188] sm:$0xff]
    %v99 = vld [vmem:[#allocation5 + $0x190] sm:$0xff]
    %v100 = vld [vmem:[#allocation5 + $0x198] sm:$0xff]
    %v101 = vld [vmem:[#allocation5 + $0x1a0] sm:$0xff]
    %v102 = vld [vmem:[#allocation5 + $0x1a8] sm:$0xff]
    %v103 = vld [vmem:[#allocation5 + $0x1b0] sm:$0xff]
    %v104 = vld [vmem:[#allocation5 + $0x1b8] sm:$0xff]
    %v105 = vld [vmem:[#allocation5 + $0x1c0] sm:$0xff]
    %v106 = vld [vmem:[#allocation5 + $0x1c8] sm:$0xff]
    %v107 = vld [vmem:[#allocation5 + $0x1d0] sm:$0xff]
    %v108 = vld [vmem:[#allocation5 + $0x1d8] sm:$0xff]
    %v109 = vld [vmem:[#allocation5 + $0x1e0] sm:$0xff]
    %v110 = vld [vmem:[#allocation5 + $0x1e8] sm:$0xff]
    %v111 = vld [vmem:[#allocation5 + $0x1f0] sm:$0xff]
    %v112 = vld [vmem:[#allocation5 + $0x1f8] sm:$0xff]
    %v113 = vld [vmem:[%s2] sm:$0x1]
    %v115 = vperm.slane %v113, 0
    %117 = vmatpush.msra.mxu0 %v64
    %118 = vmatpush.msra.mxu0 %v63
    %119 = vmatpush.msra.mxu0 %v62
    %120 = vmatpush.msra.mxu0 %v61
    %121 = vmatpush.msra.mxu0 %v60
    %122 = vmatpush.msra.mxu0 %v59
    %123 = vmatpush.msra.mxu0 %v58
    %124 = vmatpush.msra.mxu0 %v57
    %125 = vmatpush.msra.mxu0 %v56
    %126 = vmatpush.msra.mxu0 %v55
    %127 = vmatpush.msra.mxu0 %v54
    %128 = vmatpush.msra.mxu0 %v53
    %129 = vmatpush.msra.mxu0 %v52
    %130 = vmatpush.msra.mxu0 %v51
    %131 = vmatpush.msra.mxu0 %v50
    %132 = vmatpush.msra.mxu0 %v49
    %133 = vmatmul.f32.gmra.mxu0 %v45
    %v134 = vpop.f32.mrf.mxu0
    %v135 = vadd.f32 %v115, %v134
    %136 = vdwg.mxu0
    %137 = vmatpush.msra.mxu0 %v80
    %138 = vmatpush.msra.mxu0 %v79
    %139 = vmatpush.msra.mxu0 %v78
    %140 = vmatpush.msra.mxu0 %v77
    %141 = vmatpush.msra.mxu0 %v76
    %142 = vmatpush.msra.mxu0 %v75
    %143 = vmatpush.msra.mxu0 %v74
    %144 = vmatpush.msra.mxu0 %v73
    %145 = vmatpush.msra.mxu0 %v72
    %146 = vmatpush.msra.mxu0 %v71
    %147 = vmatpush.msra.mxu0 %v70
    %148 = vmatpush.msra.mxu0 %v69
    %149 = vmatpush.msra.mxu0 %v68
    %150 = vmatpush.msra.mxu0 %v67
    %151 = vmatpush.msra.mxu0 %v66
    %152 = vmatpush.msra.mxu0 %v65
    %153 = vmatmul.f32.gmra.mxu0 %v46
    %v154 = vpop.f32.mrf.mxu0
    %v155 = vadd.f32 %v135, %v154
    %156 = vdwg.mxu0
    %157 = vmatpush.msra.mxu0 %v96
    %158 = vmatpush.msra.mxu0 %v95
    %159 = vmatpush.msra.mxu0 %v94
    %160 = vmatpush.msra.mxu0 %v93
    %161 = vmatpush.msra.mxu0 %v92
    %162 = vmatpush.msra.mxu0 %v91
    %163 = vmatpush.msra.mxu0 %v90
    %164 = vmatpush.msra.mxu0 %v89
    %165 = vmatpush.msra.mxu0 %v88
    %166 = vmatpush.msra.mxu0 %v87
    %167 = vmatpush.msra.mxu0 %v86
    %168 = vmatpush.msra.mxu0 %v85
    %169 = vmatpush.msra.mxu0 %v84
    %170 = vmatpush.msra.mxu0 %v83
    %171 = vmatpush.msra.mxu0 %v82
    %172 = vmatpush.msra.mxu0 %v81
    %173 = vmatmul.f32.gmra.mxu0 %v47
    %v174 = vpop.f32.mrf.mxu0
    %v175 = vadd.f32 %v155, %v174
    %176 = vdwg.mxu0
    %177 = vmatpush.msra.mxu0 %v112
    %178 = vmatpush.msra.mxu0 %v111
    %179 = vmatpush.msra.mxu0 %v110
    %180 = vmatpush.msra.mxu0 %v109
    %181 = vmatpush.msra.mxu0 %v108
    %182 = vmatpush.msra.mxu0 %v107
    %183 = vmatpush.msra.mxu0 %v106
    %184 = vmatpush.msra.mxu0 %v105
    %185 = vmatpush.msra.mxu0 %v104
    %186 = vmatpush.msra.mxu0 %v103
    %187 = vmatpush.msra.mxu0 %v102
    %188 = vmatpush.msra.mxu0 %v101
    %189 = vmatpush.msra.mxu0 %v100
    %190 = vmatpush.msra.mxu0 %v99
    %191 = vmatpush.msra.mxu0 %v98
    %192 = vmatpush.msra.mxu0 %v97
    %193 = vmatmul.f32.gmra.mxu0 %v48
    %v194 = vpop.f32.mrf.mxu0
    %v195 = vadd.f32 %v175, %v194
    %196 = vdwg.mxu0
    %v197 = vmax.f32 %v195, 0.0
    %198 = vst [vmem:[#allocation7] sm:$0xff] %v197
    // Predicated region
    $region22: #{tpu_custom_call.1} parent=1 // pred_check
      _
    $region23: #{tpu_custom_call.1} parent=1 // pred_check_branch
      %200 = sbr.rel (0) target = $region25
    $region24: #{tpu_custom_call.1} parent=1 // pred_region
      %202 = vsyncadd [#allocation4], 0
      %s204 = sshll.u32 [#allocation7], 4
      %s205 = int_to_ptr.vmem [resolvable:$true] %s204
      %s206 = sshll.u32 %s3, 4
      %s207 = int_to_ptr.hbm [resolvable:$true] %s206
      %209 = dma.vmem_to_hbm [thread:$0]  %s205, 128, %s207, [#allocation4]
    $region25: #{tpu_custom_call.1} parent=1 // pred_fallthru
      _
    // Predicated region
    $region26: #{tpu_custom_call.1} parent=1 // pred_check
      _
    $region27: #{tpu_custom_call.1} parent=1 // pred_check_branch
      %211 = sbr.rel (0) target = $region29
    $region28: #{tpu_custom_call.1} parent=1 // pred_region
      %213 = dma.done [#allocation4], 128
    $region29: #{tpu_custom_call.1} parent=1 // pred_fallthru
      _
    %214 = vsyncpa [#allocation3], 1
    %215 = vsyncpa [#allocation6], 1
    %216 = vsyncpa [#allocation4], 1

</llo_original>
